<compile_context>
chip_gen: v7x
topology: tpu7x:2x2x1
jax: 0.10.0
libtpu: 0.0.40
codegen_flags: <defaults>
</compile_context>

<pallas_src>
import jax
import jax.numpy as jnp
from jax import lax
from jax.experimental import pallas as pl
from jax.experimental.pallas import tpu as pltpu

LANE = 128     # TPU lane width
SUBLANE = 8    # TPU sublane width


def _round_up(n, m):
    return ((n + m - 1) // m) * m


def _pad2(a, rows, cols):
    r, c = a.shape
    return jnp.pad(a, ((0, rows - r), (0, cols - c)))


def _full_spec(shape):
    return pl.BlockSpec(shape, lambda i: (0, 0))


# ---------------------------------------------------------------------------
# Fused Pallas kernel: conv stack (as dense matmuls) + head + reparametrize
# ---------------------------------------------------------------------------

def _make_encoder_kernel(n_layers):
    """Kernel refs: x, (M_l, b_l)*n, W_head, b_head, eps, mu, logvar, rp."""

    def kernel(*refs):
        x_ref = refs[0]
        conv_refs = refs[1:1 + 2 * n_layers]
        wh_ref, bh_ref, eps_ref = refs[1 + 2 * n_layers:4 + 2 * n_layers]
        mu_ref, logvar_ref, rp_ref = refs[4 + 2 * n_layers:]

        h = x_ref[...]                                        # (Bp, Din_p)
        for l in range(n_layers):                             # unrolled
            w_ref = conv_refs[2 * l]
            b_ref = conv_refs[2 * l + 1]
            y = jnp.dot(h, w_ref[...],
                        preferred_element_type=jnp.float32) + b_ref[...]
            h = jnp.where(y > 0, y, 0.01 * y)                 # LeakyReLU(0.01)

        # fused head: [:, :LANE] = mean half, [:, LANE:] = logvar half
        z = jnp.dot(h, wh_ref[...],
                    preferred_element_type=jnp.float32) + bh_ref[...]
        mu = z[:, :LANE]
        logvar = z[:, LANE:]
        mu_ref[...] = mu
        logvar_ref[...] = logvar
        rp_ref[...] = mu + jnp.exp(0.5 * logvar) * eps_ref[...]

    return kernel


# ---------------------------------------------------------------------------
# One-time parameter preparation (hoisted out of the forward hot path)
# ---------------------------------------------------------------------------

def _conv_to_dense(w_oihw, b, h_in, w_in, stride=2, pad=1):
    """Fold a Conv2d into a dense matrix acting on the CHW-flattened sample.

    Returns (M, bias_vec, (h_out, w_out)) with  y_flat = x_flat @ M + bias_vec,
    where x_flat = x[b].reshape(-1) in NCHW (i.e. PyTorch .view) order.
    """
    cout, cin, _, _ = w_oihw.shape
    d_in = cin * h_in * w_in
    basis = jnp.eye(d_in, dtype=jnp.float32).reshape(d_in, cin, h_in, w_in)
    out = lax.conv_general_dilated(
        basis, w_oihw.astype(jnp.float32),
        window_strides=(stride, stride),
        padding=((pad, pad), (pad, pad)),
        dimension_numbers=("NCHW", "OIHW", "NCHW"))
    _, _, h_out, w_out = out.shape
    m = out.reshape(d_in, cout * h_out * w_out)
    bias_vec = jnp.repeat(b.astype(jnp.float32), h_out * w_out)
    return m, bias_vec, (h_out, w_out)


def prepare_params(params, in_hw=(8, 8)):
    """Pre-compute dense conv matrices + fused head, padded to (8,128) tiles."""
    h, w = in_hw
    mats = []
    for (wconv, bconv) in params["convs"]:
        m, bv, (h, w) = _conv_to_dense(wconv, bconv, h, w)
        d_in, d_out = m.shape
        d_in_p = _round_up(d_in, LANE)
        d_out_p = _round_up(d_out, LANE)
        mats.append((_pad2(m, d_in_p, d_out_p),
                     _pad2(bv.reshape(1, -1), 1, d_out_p)))

    wm, bm = params["fc_mean"]      # (L, F), (L,)
    wl, bl = params["fc_logvar"]
    L, F = wm.shape
    assert L <= LANE
    Fp = _round_up(F, LANE)
    assert Fp == mats[-1][0].shape[1], "conv output / fc input width mismatch"

    wh = jnp.zeros((Fp, 2 * LANE), jnp.float32)
    wh = wh.at[:F, :L].set(wm.T.astype(jnp.float32))
    wh = wh.at[:F, LANE:LANE + L].set(wl.T.astype(jnp.float32))
    bh = jnp.zeros((1, 2 * LANE), jnp.float32)
    bh = bh.at[0, :L].set(bm.astype(jnp.float32))
    bh = bh.at[0, LANE:LANE + L].set(bl.astype(jnp.float32))

    return {"mats": mats, "head_w": wh, "head_b": bh}


# ---------------------------------------------------------------------------
# Forward (jitted): one fused pallas_call
# ---------------------------------------------------------------------------

@jax.jit
def encoder_forward(prepped, x_nchw, eps):
    """Encoder.forward for model_name='VAE'. Returns (mu, logvar, rp)."""
    B = x_nchw.shape[0]
    L = eps.shape[1]
    Bp = _round_up(max(B, 1), SUBLANE)

    mats = prepped["mats"]
    d_in_p = mats[0][0].shape[0]

    x_flat = x_nchw.reshape(B, -1).astype(jnp.float32)    # NCHW .view order
    x_p = _pad2(x_flat, Bp, d_in_p)
    eps_p = _pad2(eps.astype(jnp.float32), Bp, LANE)

    operands = [x_p]
    in_specs = [_full_spec(x_p.shape)]
    for m, bv in mats:
        operands += [m, bv]
        in_specs += [_full_spec(m.shape), _full_spec(bv.shape)]
    operands += [prepped["head_w"], prepped["head_b"], eps_p]
    in_specs += [_full_spec(prepped["head_w"].shape),
                 _full_spec(prepped["head_b"].shape),
                 _full_spec(eps_p.shape)]

    out_shape = tuple(jax.ShapeDtypeStruct((Bp, LANE), jnp.float32)
                      for _ in range(3))
    out_specs = tuple(_full_spec((Bp, LANE)) for _ in range(3))

    mu_p, logvar_p, rp_p = pl.pallas_call(
        _make_encoder_kernel(len(mats)),
        out_shape=out_shape,
        grid=(1,),
        in_specs=in_specs,
        out_specs=out_specs,
        compiler_params=pltpu.CompilerParams(
            dimension_semantics=("arbitrary",)),
    )(*operands)

    # TODO(synk): for large batches, tile the Bp axis with a "parallel" grid
    # dimension so v7x's two TensorCores split the batch.
    return mu_p[:B, :L], logvar_p[:B, :L], rp_p[:B, :L]


# ---------------------------------------------------------------------------
# Synthetic parameters (same shapes as the nn.Module)
# ---------------------------------------------------------------------------

def init_params(key, in_channels=1, hidden_dims=(16, 32, 64), latent_dim=2):
    keys = jax.random.split(key, 2 * len(hidden_dims) + 4)
    convs = []
    cin = in_channels
    ki = 0
    for hdim in hidden_dims:
        w = 0.1 * jax.random.normal(keys[ki], (hdim, cin, 4, 4), jnp.float32); ki += 1
        b = 0.1 * jax.random.normal(keys[ki], (hdim,), jnp.float32); ki += 1
        convs.append((w, b))
        cin = hdim
    wm = 0.1 * jax.random.normal(keys[ki], (latent_dim, hidden_dims[-1]), jnp.float32); ki += 1
    bm = 0.1 * jax.random.normal(keys[ki], (latent_dim,), jnp.float32); ki += 1
    wl = 0.1 * jax.random.normal(keys[ki], (latent_dim, hidden_dims[-1]), jnp.float32); ki += 1
    bl = 0.1 * jax.random.normal(keys[ki], (latent_dim,), jnp.float32); ki += 1
    return {"convs": convs, "fc_mean": (wm, bm), "fc_logvar": (wl, bl)}


if __name__ == "__main__":
    key = jax.random.PRNGKey(0)
    k_x, k_eps, k_p = jax.random.split(key, 3)

    B, C, H, W = 2, 1, 8, 8          # 8x8 so the flatten matches Linear(64, 2)
    latent_dim = 2

    x = jax.random.normal(k_x, (B, C, H, W), jnp.float32)
    eps = jax.random.normal(k_eps, (B, latent_dim), jnp.float32)
    params = init_params(k_p, in_channels=C, hidden_dims=(16, 32, 64),
                         latent_dim=latent_dim)

    prepped = prepare_params(params, in_hw=(H, W))   # one-time weight prep
    prepped = jax.tree_util.tree_map(jax.block_until_ready, prepped)

    mu, logvar, rp = encoder_forward(prepped, x, eps)
    jax.block_until_ready((mu, logvar, rp))

    assert mu.shape == (B, latent_dim)
    assert logvar.shape == (B, latent_dim)
    assert rp.shape == (B, latent_dim)

    # lightweight correctness check against a pure-JAX reference
    def ref_forward(params, x_nchw, eps):
        xr = x_nchw
        for (w, b) in params["convs"]:
            xr = lax.conv_general_dilated(
                xr, w, window_strides=(2, 2), padding=((1, 1), (1, 1)),
                dimension_numbers=("NCHW", "OIHW", "NCHW"))
            xr = xr + b[None, :, None, None]
            xr = jnp.where(xr > 0, xr, 0.01 * xr)
        flat = xr.reshape(xr.shape[0], -1)
        wm, bm = params["fc_mean"]
        wl, bl = params["fc_logvar"]
        rmu = flat @ wm.T + bm
        rlogvar = flat @ wl.T + bl
        return rmu, rlogvar, rmu + jnp.exp(0.5 * rlogvar) * eps

    rmu, rlogvar, rrp = ref_forward(params, x, eps)
    assert jnp.allclose(mu, rmu, atol=1e-4), (mu, rmu)
    assert jnp.allclose(logvar, rlogvar, atol=1e-4), (logvar, rlogvar)
    assert jnp.allclose(rp, rrp, atol=1e-4), (rp, rrp)

    print("KERNEL_OK")
</pallas_src>

<mosaic_0001>
module attributes {stable_mosaic.version = 11 : i64} {
  func.func @kernel(%arg0: i32, %arg1: memref<8x128xf32, #tpu.memory_space<vmem>>, %arg2: memref<128x256xf32, #tpu.memory_space<vmem>>, %arg3: memref<1x256xf32, #tpu.memory_space<vmem>>, %arg4: memref<256x128xf32, #tpu.memory_space<vmem>>, %arg5: memref<1x128xf32, #tpu.memory_space<vmem>>, %arg6: memref<128x128xf32, #tpu.memory_space<vmem>>, %arg7: memref<1x128xf32, #tpu.memory_space<vmem>>, %arg8: memref<128x256xf32, #tpu.memory_space<vmem>>, %arg9: memref<1x256xf32, #tpu.memory_space<vmem>>, %arg10: memref<8x128xf32, #tpu.memory_space<vmem>>, %arg11: memref<8x128xf32, #tpu.memory_space<vmem>>, %arg12: memref<8x128xf32, #tpu.memory_space<vmem>>, %arg13: memref<8x128xf32, #tpu.memory_space<vmem>>) attributes {dimension_semantics = [#tpu.dimension_semantics<arbitrary>], iteration_bounds = array<i64: 1>, scalar_prefetch = 0 : i64, scratch_operands = 0 : i64, tpu.core_type = #tpu.core_type<tc>, window_params = [{pipeline_mode = #tpu.pipeline_mode<synchronous>, transform_indices = @transform_0, window_bounds = array<i64: 8, 128>}, {pipeline_mode = #tpu.pipeline_mode<synchronous>, transform_indices = @transform_1, window_bounds = array<i64: 128, 256>}, {pipeline_mode = #tpu.pipeline_mode<synchronous>, transform_indices = @transform_2, window_bounds = array<i64: 1, 256>}, {pipeline_mode = #tpu.pipeline_mode<synchronous>, transform_indices = @transform_3, window_bounds = array<i64: 256, 128>}, {pipeline_mode = #tpu.pipeline_mode<synchronous>, transform_indices = @transform_4, window_bounds = array<i64: 1, 128>}, {pipeline_mode = #tpu.pipeline_mode<synchronous>, transform_indices = @transform_5, window_bounds = array<i64: 128, 128>}, {pipeline_mode = #tpu.pipeline_mode<synchronous>, transform_indices = @transform_6, window_bounds = array<i64: 1, 128>}, {pipeline_mode = #tpu.pipeline_mode<synchronous>, transform_indices = @transform_7, window_bounds = array<i64: 128, 256>}, {pipeline_mode = #tpu.pipeline_mode<synchronous>, transform_indices = @transform_8, window_bounds = array<i64: 1, 256>}, {pipeline_mode = #tpu.pipeline_mode<synchronous>, transform_indices = @transform_9, window_bounds = array<i64: 8, 128>}, {pipeline_mode = #tpu.pipeline_mode<synchronous>, transform_indices = @transform_10, window_bounds = array<i64: 8, 128>}, {pipeline_mode = #tpu.pipeline_mode<synchronous>, transform_indices = @transform_11, window_bounds = array<i64: 8, 128>}, {pipeline_mode = #tpu.pipeline_mode<synchronous>, transform_indices = @transform_12, window_bounds = array<i64: 8, 128>}]} {
    %c0 = arith.constant 0 : index
    %c0_0 = arith.constant 0 : index
    %0 = vector.load %arg1[%c0, %c0_0] : memref<8x128xf32, #tpu.memory_space<vmem>>, vector<8x128xf32>
    %c0_1 = arith.constant 0 : index
    %c0_2 = arith.constant 0 : index
    %1 = vector.load %arg2[%c0_1, %c0_2] : memref<128x256xf32, #tpu.memory_space<vmem>>, vector<128x256xf32>
    %cst = arith.constant dense<0.000000e+00> : vector<8x256xf32>
    %2 = tpu.matmul %0, %1, %cst {dimension_numbers = #tpu.dot_dimension_numbers<[1], [0], [0], [1], [0, 0, 1, 1], [], []>} : vector<8x128xf32>, vector<128x256xf32>, vector<8x256xf32> -> vector<8x256xf32>
    %c0_3 = arith.constant 0 : index
    %c0_4 = arith.constant 0 : index
    %3 = vector.load %arg3[%c0_3, %c0_4] : memref<1x256xf32, #tpu.memory_space<vmem>>, vector<1x256xf32>
    %4 = vector.broadcast %3 : vector<1x256xf32> to vector<8x256xf32>
    %5 = arith.addf %2, %4 : vector<8x256xf32>
    %cst_5 = arith.constant 0.000000e+00 : f32
    %6 = vector.broadcast %cst_5 : f32 to vector<8x256xf32>
    %7 = arith.cmpf ogt, %5, %6 : vector<8x256xf32>
    %cst_6 = arith.constant 0.00999999977 : f32
    %8 = vector.broadcast %cst_6 : f32 to vector<8x256xf32>
    %9 = arith.mulf %8, %5 : vector<8x256xf32>
    %10 = arith.select %7, %5, %9 : vector<8x256xi1>, vector<8x256xf32>
    %c0_7 = arith.constant 0 : index
    %c0_8 = arith.constant 0 : index
    %11 = vector.load %arg4[%c0_7, %c0_8] : memref<256x128xf32, #tpu.memory_space<vmem>>, vector<256x128xf32>
    %cst_9 = arith.constant dense<0.000000e+00> : vector<8x128xf32>
    %12 = tpu.matmul %10, %11, %cst_9 {dimension_numbers = #tpu.dot_dimension_numbers<[1], [0], [0], [1], [0, 0, 1, 1], [], []>} : vector<8x256xf32>, vector<256x128xf32>, vector<8x128xf32> -> vector<8x128xf32>
    %c0_10 = arith.constant 0 : index
    %c0_11 = arith.constant 0 : index
    %13 = vector.load %arg5[%c0_10, %c0_11] : memref<1x128xf32, #tpu.memory_space<vmem>>, vector<1x128xf32>
    %14 = vector.broadcast %13 : vector<1x128xf32> to vector<8x128xf32>
    %15 = arith.addf %12, %14 : vector<8x128xf32>
    %cst_12 = arith.constant 0.000000e+00 : f32
    %16 = vector.broadcast %cst_12 : f32 to vector<8x128xf32>
    %17 = arith.cmpf ogt, %15, %16 : vector<8x128xf32>
    %cst_13 = arith.constant 0.00999999977 : f32
    %18 = vector.broadcast %cst_13 : f32 to vector<8x128xf32>
    %19 = arith.mulf %18, %15 : vector<8x128xf32>
    %20 = arith.select %17, %15, %19 : vector<8x128xi1>, vector<8x128xf32>
    %c0_14 = arith.constant 0 : index
    %c0_15 = arith.constant 0 : index
    %21 = vector.load %arg6[%c0_14, %c0_15] : memref<128x128xf32, #tpu.memory_space<vmem>>, vector<128x128xf32>
    %cst_16 = arith.constant dense<0.000000e+00> : vector<8x128xf32>
    %22 = tpu.matmul %20, %21, %cst_16 {dimension_numbers = #tpu.dot_dimension_numbers<[1], [0], [0], [1], [0, 0, 1, 1], [], []>} : vector<8x128xf32>, vector<128x128xf32>, vector<8x128xf32> -> vector<8x128xf32>
    %c0_17 = arith.constant 0 : index
    %c0_18 = arith.constant 0 : index
    %23 = vector.load %arg7[%c0_17, %c0_18] : memref<1x128xf32, #tpu.memory_space<vmem>>, vector<1x128xf32>
    %24 = vector.broadcast %23 : vector<1x128xf32> to vector<8x128xf32>
    %25 = arith.addf %22, %24 : vector<8x128xf32>
    %cst_19 = arith.constant 0.000000e+00 : f32
    %26 = vector.broadcast %cst_19 : f32 to vector<8x128xf32>
    %27 = arith.cmpf ogt, %25, %26 : vector<8x128xf32>
    %cst_20 = arith.constant 0.00999999977 : f32
    %28 = vector.broadcast %cst_20 : f32 to vector<8x128xf32>
    %29 = arith.mulf %28, %25 : vector<8x128xf32>
    %30 = arith.select %27, %25, %29 : vector<8x128xi1>, vector<8x128xf32>
    %c0_21 = arith.constant 0 : index
    %c0_22 = arith.constant 0 : index
    %31 = vector.load %arg8[%c0_21, %c0_22] : memref<128x256xf32, #tpu.memory_space<vmem>>, vector<128x256xf32>
    %cst_23 = arith.constant dense<0.000000e+00> : vector<8x256xf32>
    %32 = tpu.matmul %30, %31, %cst_23 {dimension_numbers = #tpu.dot_dimension_numbers<[1], [0], [0], [1], [0, 0, 1, 1], [], []>} : vector<8x128xf32>, vector<128x256xf32>, vector<8x256xf32> -> vector<8x256xf32>
    %c0_24 = arith.constant 0 : index
    %c0_25 = arith.constant 0 : index
    %33 = vector.load %arg9[%c0_24, %c0_25] : memref<1x256xf32, #tpu.memory_space<vmem>>, vector<1x256xf32>
    %34 = vector.broadcast %33 : vector<1x256xf32> to vector<8x256xf32>
    %35 = arith.addf %32, %34 : vector<8x256xf32>
    %36 = vector.extract_strided_slice %35 {offsets = [0, 0], sizes = [8, 128], strides = [1, 1]} : vector<8x256xf32> to vector<8x128xf32>
    %37 = vector.extract_strided_slice %35 {offsets = [0, 128], sizes = [8, 128], strides = [1, 1]} : vector<8x256xf32> to vector<8x128xf32>
    %c0_26 = arith.constant 0 : index
    %c0_27 = arith.constant 0 : index
    %38 = vector.load %arg11[%c0_26, %c0_27] : memref<8x128xf32, #tpu.memory_space<vmem>>, vector<8x128xf32>
    tpu.vector_store %arg11[%c0_26, %c0_27], %36 {strides = array<i32>} : memref<8x128xf32, #tpu.memory_space<vmem>>, vector<8x128xf32>,
    %c0_28 = arith.constant 0 : index
    %c0_29 = arith.constant 0 : index
    %39 = vector.load %arg12[%c0_28, %c0_29] : memref<8x128xf32, #tpu.memory_space<vmem>>, vector<8x128xf32>
    tpu.vector_store %arg12[%c0_28, %c0_29], %37 {strides = array<i32>} : memref<8x128xf32, #tpu.memory_space<vmem>>, vector<8x128xf32>,
    %cst_30 = arith.constant 5.000000e-01 : f32
    %40 = vector.broadcast %cst_30 : f32 to vector<8x128xf32>
    %41 = arith.mulf %40, %37 : vector<8x128xf32>
    %42 = math.exp %41 : vector<8x128xf32>
    %c0_31 = arith.constant 0 : index
    %c0_32 = arith.constant 0 : index
    %43 = vector.load %arg10[%c0_31, %c0_32] : memref<8x128xf32, #tpu.memory_space<vmem>>, vector<8x128xf32>
    %44 = arith.mulf %42, %43 : vector<8x128xf32>
    %45 = arith.addf %36, %44 : vector<8x128xf32>
    %c0_33 = arith.constant 0 : index
    %c0_34 = arith.constant 0 : index
    %46 = vector.load %arg13[%c0_33, %c0_34] : memref<8x128xf32, #tpu.memory_space<vmem>>, vector<8x128xf32>
    tpu.vector_store %arg13[%c0_33, %c0_34], %45 {strides = array<i32>} : memref<8x128xf32, #tpu.memory_space<vmem>>, vector<8x128xf32>,
    return
  }
  func.func @transform_0(%arg0: i32) -> (i32, i32) {
    %c0_i32 = arith.constant 0 : i32
    %c0_i32_0 = arith.constant 0 : i32
    %c0_i32_1 = arith.constant 0 : i32
    return %c0_i32, %c0_i32_0 : i32, i32
  }
  func.func @transform_1(%arg0: i32) -> (i32, i32) {
    %c0_i32 = arith.constant 0 : i32
    %c0_i32_0 = arith.constant 0 : i32
    %c0_i32_1 = arith.constant 0 : i32
    return %c0_i32, %c0_i32_0 : i32, i32
  }
  func.func @transform_2(%arg0: i32) -> (i32, i32) {
    %c0_i32 = arith.constant 0 : i32
    %c0_i32_0 = arith.constant 0 : i32
    %c0_i32_1 = arith.constant 0 : i32
    return %c0_i32, %c0_i32_0 : i32, i32
  }
  func.func @transform_3(%arg0: i32) -> (i32, i32) {
    %c0_i32 = arith.constant 0 : i32
    %c0_i32_0 = arith.constant 0 : i32
    %c0_i32_1 = arith.constant 0 : i32
    return %c0_i32, %c0_i32_0 : i32, i32
  }
  func.func @transform_4(%arg0: i32) -> (i32, i32) {
    %c0_i32 = arith.constant 0 : i32
    %c0_i32_0 = arith.constant 0 : i32
    %c0_i32_1 = arith.constant 0 : i32
    return %c0_i32, %c0_i32_0 : i32, i32
  }
  func.func @transform_5(%arg0: i32) -> (i32, i32) {
    %c0_i32 = arith.constant 0 : i32
    %c0_i32_0 = arith.constant 0 : i32
    %c0_i32_1 = arith.constant 0 : i32
    return %c0_i32, %c0_i32_0 : i32, i32
  }
  func.func @transform_6(%arg0: i32) -> (i32, i32) {
    %c0_i32 = arith.constant 0 : i32
    %c0_i32_0 = arith.constant 0 : i32
    %c0_i32_1 = arith.constant 0 : i32
    return %c0_i32, %c0_i32_0 : i32, i32
  }
  func.func @transform_7(%arg0: i32) -> (i32, i32) {
    %c0_i32 = arith.constant 0 : i32
    %c0_i32_0 = arith.constant 0 : i32
    %c0_i32_1 = arith.constant 0 : i32
    return %c0_i32, %c0_i32_0 : i32, i32
  }
  func.func @transform_8(%arg0: i32) -> (i32, i32) {
    %c0_i32 = arith.constant 0 : i32
    %c0_i32_0 = arith.constant 0 : i32
    %c0_i32_1 = arith.constant 0 : i32
    return %c0_i32, %c0_i32_0 : i32, i32
  }
  func.func @transform_9(%arg0: i32) -> (i32, i32) {
    %c0_i32 = arith.constant 0 : i32
    %c0_i32_0 = arith.constant 0 : i32
    %c0_i32_1 = arith.constant 0 : i32
    return %c0_i32, %c0_i32_0 : i32, i32
  }
  func.func @transform_10(%arg0: i32) -> (i32, i32) {
    %c0_i32 = arith.constant 0 : i32
    %c0_i32_0 = arith.constant 0 : i32
    %c0_i32_1 = arith.constant 0 : i32
    return %c0_i32, %c0_i32_0 : i32, i32
  }
  func.func @transform_11(%arg0: i32) -> (i32, i32) {
    %c0_i32 = arith.constant 0 : i32
    %c0_i32_0 = arith.constant 0 : i32
    %c0_i32_1 = arith.constant 0 : i32
    return %c0_i32, %c0_i32_0 : i32, i32
  }
  func.func @transform_12(%arg0: i32) -> (i32, i32) {
    %c0_i32 = arith.constant 0 : i32
    %c0_i32_0 = arith.constant 0 : i32
    %c0_i32_1 = arith.constant 0 : i32
    return %c0_i32, %c0_i32_0 : i32, i32
  }
}

</mosaic_0001>

<llo_original>
// kernel: encoder_forward.1
$region0: #{encoder_forward.1}
  #allocation0 [shape = 'u32[]', space=smem, size = 0x4, offset = 0x4, fixed_abs, tag = 'smem constant byte address 0x4 - core index']
  #allocation1 [shape = 'u32[144,128]{1,0:T(1,128)}', space=vmem, size = 0x12000, scoped, tag = 'internal scratch']
  %s0 = inlined_call_operand.vmem [shape: f32[8,128], index: 0, kind: input, shape index: {}]
  %s1 = inlined_call_operand.hbm [shape: f32[128,256], index: 1, kind: input, shape index: {}]
  %s2 = inlined_call_operand.vmem [shape: f32[1,256], index: 2, kind: input, shape index: {}]
  %s3 = inlined_call_operand.hbm [shape: f32[256,128], index: 3, kind: input, shape index: {}]
  %s4 = inlined_call_operand.vmem [shape: f32[1,128], index: 4, kind: input, shape index: {}]
  %s5 = inlined_call_operand.hbm [shape: f32[128,128], index: 5, kind: input, shape index: {}]
  %s6 = inlined_call_operand.vmem [shape: f32[1,128], index: 6, kind: input, shape index: {}]
  %s7 = inlined_call_operand.hbm [shape: f32[128,256], index: 7, kind: input, shape index: {}]
  %s8 = inlined_call_operand.vmem [shape: f32[1,256], index: 8, kind: input, shape index: {}]
  %s9 = inlined_call_operand.vmem [shape: f32[8,128], index: 9, kind: input, shape index: {}]
  %s10 = inlined_call_operand.vmem [shape: f32[8,128], index: 10, kind: output, shape index: {0}]
  %s11 = inlined_call_operand.vmem [shape: f32[8,128], index: 11, kind: output, shape index: {1}]
  %s12 = inlined_call_operand.vmem [shape: f32[8,128], index: 12, kind: output, shape index: {2}]
  %13 = xla_tuple %s10, %s11, %s12
  %s14 = sld [smem:[#allocation0]]
  $region82: #{encoder_forward.1} parent=0
    _
  %s16 = ssub.s32 1, %s14
  %s17 = scalar_select 0, %s16, %s14
  $region1: #{encoder_forward.1} parent=0
    #allocation2 [shape = 'u8[131072]{0}', space=vmem, size = 0x20000, scoped, tag = 'input window, operand 1, single buffered']
    #allocation3 [shape = 's32[1]{0}', space=sflag, size = 0x4, scoped, tag = 'scoped memory for encoder_forward.1']
    #allocation4 [shape = 'u8[131072]{0}', space=vmem, size = 0x20000, scoped, tag = 'input window, operand 3, single buffered']
    #allocation5 [shape = 's32[1]{0}', space=sflag, size = 0x4, scoped, tag = 'scoped memory for encoder_forward.1']
    #allocation6 [shape = 'u8[65536]{0}', space=vmem, size = 0x10000, scoped, tag = 'input window, operand 5, single buffered']
    #allocation7 [shape = 'u8[131072]{0}', space=vmem, size = 0x20000, scoped, tag = 'input window, operand 7, single buffered']
    #allocation8 [shape = 's32[1]{0}', space=sflag, size = 0x4, scoped, tag = 'scoped memory for encoder_forward.1']
    %18 = vsyncpa [#allocation3], 0
    %19 = vsyncpa [#allocation5], 0
    %20 = vsyncpa [#allocation8], 0
    // Predicated region
    $region2: #{encoder_forward.1} parent=1 // pred_check
      _
    $region3: #{encoder_forward.1} parent=1 // pred_check_branch
      %22 = sbr.rel (0) target = $region5
    $region4: #{encoder_forward.1} parent=1 // pred_region
      _
    $region5: #{encoder_forward.1} parent=1 // pred_fallthru
      _
    // Predicated region
    $region6: #{encoder_forward.1} parent=1 // pred_check
      _
    $region7: #{encoder_forward.1} parent=1 // pred_check_branch
      %24 = sbr.rel (0) target = $region9
    $region8: #{encoder_forward.1} parent=1 // pred_region
      %s26 = ssub.s32 4096, 4096
      %27 = vsyncadd [#allocation3], %s26
      %s28 = sshll.u32 [#allocation2], 4
      %s29 = int_to_ptr.vmem [resolvable:$true] %s28
      %34 = dma.hbm_to_vmem [thread:$0]  %s1, 4096, %s29, [#allocation3], 256, 256, 16
    $region9: #{encoder_forward.1} parent=1 // pred_fallthru
      _
    // Predicated region
    $region10: #{encoder_forward.1} parent=1 // pred_check
      _
    $region11: #{encoder_forward.1} parent=1 // pred_check_branch
      %36 = sbr.rel (0) target = $region13
    $region12: #{encoder_forward.1} parent=1 // pred_region
      _
    $region13: #{encoder_forward.1} parent=1 // pred_fallthru
      _
    // Predicated region
    $region14: #{encoder_forward.1} parent=1 // pred_check
      _
    $region15: #{encoder_forward.1} parent=1 // pred_check_branch
      %38 = sbr.rel (0) target = $region17
    $region16: #{encoder_forward.1} parent=1 // pred_region
      %s40 = ssub.s32 4096, 4096
      %41 = vsyncadd [#allocation5], %s40
      %s42 = sshll.u32 [#allocation4], 4
      %s43 = int_to_ptr.vmem [resolvable:$true] %s42
      %48 = dma.hbm_to_vmem [thread:$0]  %s3, 4096, %s43, [#allocation5], 128, 128, 8
    $region17: #{encoder_forward.1} parent=1 // pred_fallthru
      _
    // Predicated region
    $region18: #{encoder_forward.1} parent=1 // pred_check
      _
    $region19: #{encoder_forward.1} parent=1 // pred_check_branch
      %50 = sbr.rel (0) target = $region21
    $region20: #{encoder_forward.1} parent=1 // pred_region
      _
    $region21: #{encoder_forward.1} parent=1 // pred_fallthru
      _
    // Predicated region
    $region22: #{encoder_forward.1} parent=1 // pred_check
      _
    $region23: #{encoder_forward.1} parent=1 // pred_check_branch
      %52 = sbr.rel (0) target = $region25
    $region24: #{encoder_forward.1} parent=1 // pred_region
      %s54 = ssub.s32 2048, 2048
      %55 = vsyncadd [#allocation5], %s54
      %s56 = sshll.u32 [#allocation6], 4
      %s57 = int_to_ptr.vmem [resolvable:$true] %s56
      %62 = dma.hbm_to_vmem [thread:$0]  %s5, 2048, %s57, [#allocation5], 128, 128, 8
    $region25: #{encoder_forward.1} parent=1 // pred_fallthru
      _
    // Predicated region
    $region26: #{encoder_forward.1} parent=1 // pred_check
      _
    $region27: #{encoder_forward.1} parent=1 // pred_check_branch
      %64 = sbr.rel (0) target = $region29
    $region28: #{encoder_forward.1} parent=1 // pred_region
      _
    $region29: #{encoder_forward.1} parent=1 // pred_fallthru
      _
    // Predicated region
    $region30: #{encoder_forward.1} parent=1 // pred_check
      _
    $region31: #{encoder_forward.1} parent=1 // pred_check_branch
      %66 = sbr.rel (0) target = $region33
    $region32: #{encoder_forward.1} parent=1 // pred_region
      %s68 = ssub.s32 4096, 4096
      %69 = vsyncadd [#allocation8], %s68
      %s70 = sshll.u32 [#allocation7], 4
      %s71 = int_to_ptr.vmem [resolvable:$true] %s70
      %76 = dma.hbm_to_vmem [thread:$0]  %s7, 4096, %s71, [#allocation8], 256, 256, 16
    $region33: #{encoder_forward.1} parent=1 // pred_fallthru
      _
    // Predicated region
    $region34: #{encoder_forward.1} parent=1 // pred_check
      _
    $region35: #{encoder_forward.1} parent=1 // pred_check_branch
      %78 = sbr.rel (0) target = $region37
    $region36: #{encoder_forward.1} parent=1 // pred_region
      _
    $region37: #{encoder_forward.1} parent=1 // pred_fallthru
      _
    // Predicated region
    $region38: #{encoder_forward.1} parent=1 // pred_check
      _
    $region39: #{encoder_forward.1} parent=1 // pred_check_branch
      %80 = sbr.rel (0) target = $region41
    $region40: #{encoder_forward.1} parent=1 // pred_region
      _
    $region41: #{encoder_forward.1} parent=1 // pred_fallthru
      _
    // Predicated region
    $region42: #{encoder_forward.1} parent=1 // pred_check
      _
    $region43: #{encoder_forward.1} parent=1 // pred_check_branch
      %82 = sbr.rel (0) target = $region45
    $region44: #{encoder_forward.1} parent=1 // pred_region
      %83 = dma.done [#allocation3], 4096
    $region45: #{encoder_forward.1} parent=1 // pred_fallthru
      _
    // Predicated region
    $region46: #{encoder_forward.1} parent=1 // pred_check
      _
    $region47: #{encoder_forward.1} parent=1 // pred_check_branch
      %85 = sbr.rel (0) target = $region49
    $region48: #{encoder_forward.1} parent=1 // pred_region
      %86 = dma.done [#allocation5], 4096
    $region49: #{encoder_forward.1} parent=1 // pred_fallthru
      _
    // Predicated region
    $region50: #{encoder_forward.1} parent=1 // pred_check
      _
    $region51: #{encoder_forward.1} parent=1 // pred_check_branch
      %88 = sbr.rel (0) target = $region53
    $region52: #{encoder_forward.1} parent=1 // pred_region
      %89 = dma.done [#allocation5], 2048
    $region53: #{encoder_forward.1} parent=1 // pred_fallthru
      _
    // Predicated region
    $region54: #{encoder_forward.1} parent=1 // pred_check
      _
    $region55: #{encoder_forward.1} parent=1 // pred_check_branch
      %91 = sbr.rel (0) target = $region57
    $region56: #{encoder_forward.1} parent=1 // pred_region
      %92 = dma.done [#allocation8], 4096
    $region57: #{encoder_forward.1} parent=1 // pred_fallthru
      _
    %v93 = vld [vmem:[%s0] sm:$0xff]
    %v94 = vld [vmem:[#allocation2] sm:$0xff]
    %v95 = vld [vmem:[#allocation2 + $0x8] sm:$0xff]
    %v96 = vld [vmem:[#allocation2 + $0x10] sm:$0xff]
    %v97 = vld [vmem:[#allocation2 + $0x18] sm:$0xff]
    %v98 = vld [vmem:[#allocation2 + $0x20] sm:$0xff]
    %v99 = vld [vmem:[#allocation2 + $0x28] sm:$0xff]
    %v100 = vld [vmem:[#allocation2 + $0x30] sm:$0xff]
    %v101 = vld [vmem:[#allocation2 + $0x38] sm:$0xff]
    %v102 = vld [vmem:[#allocation2 + $0x40] sm:$0xff]
    %v103 = vld [vmem:[#allocation2 + $0x48] sm:$0xff]
    %v104 = vld [vmem:[#allocation2 + $0x50] sm:$0xff]
    %v105 = vld [vmem:[#allocation2 + $0x58] sm:$0xff]
    %v106 = vld [vmem:[#allocation2 + $0x60] sm:$0xff]
    %v107 = vld [vmem:[#allocation2 + $0x68] sm:$0xff]
    %v108 = vld [vmem:[#allocation2 + $0x70] sm:$0xff]
    %v109 = vld [vmem:[#allocation2 + $0x78] sm:$0xff]
    %v110 = vld [vmem:[#allocation2 + $0x80] sm:$0xff]
    %v111 = vld [vmem:[#allocation2 + $0x88] sm:$0xff]
    %v112 = vld [vmem:[#allocation2 + $0x90] sm:$0xff]
    %v113 = vld [vmem:[#allocation2 + $0x98] sm:$0xff]
    %v114 = vld [vmem:[#allocation2 + $0xa0] sm:$0xff]
    %v115 = vld [vmem:[#allocation2 + $0xa8] sm:$0xff]
    %v116 = vld [vmem:[#allocation2 + $0xb0] sm:$0xff]
    %v117 = vld [vmem:[#allocation2 + $0xb8] sm:$0xff]
    %v118 = vld [vmem:[#allocation2 + $0xc0] sm:$0xff]
    %v119 = vld [vmem:[#allocation2 + $0xc8] sm:$0xff]
    %v120 = vld [vmem:[#allocation2 + $0xd0] sm:$0xff]
    %v121 = vld [vmem:[#allocation2 + $0xd8] sm:$0xff]
    %v122 = vld [vmem:[#allocation2 + $0xe0] sm:$0xff]
    %v123 = vld [vmem:[#allocation2 + $0xe8] sm:$0xff]
    %v124 = vld [vmem:[#allocation2 + $0xf0] sm:$0xff]
    %v125 = vld [vmem:[#allocation2 + $0xf8] sm:$0xff]
    %v126 = vld [vmem:[%s2] sm:$0x3]
    %v128 = vlaneseq
    %v129 = vshrl.u32 %v128, 7
    %v130 = vsub.s32 0, %v129
    %v131 = vrot.slane %v126, %v130
    %v132 = vlaneseq
    %v133 = vshrl.u32 %v132, 7
    %v134 = vsub.s32 1, %v133
    %v135 = vrot.slane %v126, %v134
    %138 = vmatprep.subr.mxu0 %v95
    %139 = vmatpush1.msra.mxu0 %v94
    %140 = vmatprep.subr.mxu0 %v97
    %141 = vmatpush1.msra.mxu0 %v96
    %142 = vmatprep.subr.mxu0 %v99
    %143 = vmatpush1.msra.mxu0 %v98
    %144 = vmatprep.subr.mxu0 %v101
    %145 = vmatpush1.msra.mxu0 %v100
    %146 = vmatprep.subr.mxu0 %v103
    %147 = vmatpush1.msra.mxu0 %v102
    %148 = vmatprep.subr.mxu0 %v105
    %149 = vmatpush1.msra.mxu0 %v104
    %150 = vmatprep.subr.mxu0 %v107
    %151 = vmatpush1.msra.mxu0 %v106
    %152 = vmatprep.subr.mxu0 %v109
    %153 = vmatpush1.msra.mxu0 %v108
    %154 = vmatprep.subr.mxu0 %v111
    %155 = vmatpush1.msra.mxu0 %v110
    %156 = vmatprep.subr.mxu0 %v113
    %157 = vmatpush1.msra.mxu0 %v112
    %158 = vmatprep.subr.mxu0 %v115
    %159 = vmatpush1.msra.mxu0 %v114
    %160 = vmatprep.subr.mxu0 %v117
    %161 = vmatpush1.msra.mxu0 %v116
    %162 = vmatprep.subr.mxu0 %v119
    %163 = vmatpush1.msra.mxu0 %v118
    %164 = vmatprep.subr.mxu0 %v121
    %165 = vmatpush1.msra.mxu0 %v120
    %166 = vmatprep.subr.mxu0 %v123
    %167 = vmatpush1.msra.mxu0 %v122
    %168 = vmatprep.subr.mxu0 %v125
    %169 = vmatpush1.msra.mxu0 %v124
    %170 = vmatprep.subr.mxu0 0.0
    %171 = vmatpush1.msra.mxu0 0.0
    %172 = vmatprep.subr.mxu0 0.0
    %173 = vmatpush1.msra.mxu0 0.0
    %174 = vmatprep.subr.mxu0 0.0
    %175 = vmatpush1.msra.mxu0 0.0
    %176 = vmatprep.subr.mxu0 0.0
    %177 = vmatpush1.msra.mxu0 0.0
    %178 = vmatprep.subr.mxu0 0.0
    %179 = vmatpush1.msra.mxu0 0.0
    %180 = vmatprep.subr.mxu0 0.0
    %181 = vmatpush1.msra.mxu0 0.0
    %182 = vmatprep.subr.mxu0 0.0
    %183 = vmatpush1.msra.mxu0 0.0
    %184 = vmatprep.subr.mxu0 0.0
    %185 = vmatpush1.msra.mxu0 0.0
    %186 = vmatprep.subr.mxu0 0.0
    %187 = vmatpush1.msra.mxu0 0.0
    %188 = vmatprep.subr.mxu0 0.0
    %189 = vmatpush1.msra.mxu0 0.0
    %190 = vmatprep.subr.mxu0 0.0
    %191 = vmatpush1.msra.mxu0 0.0
    %192 = vmatprep.subr.mxu0 0.0
    %193 = vmatpush1.msra.mxu0 0.0
    %194 = vmatprep.subr.mxu0 0.0
    %195 = vmatpush1.msra.mxu0 0.0
    %196 = vmatprep.subr.mxu0 0.0
    %197 = vmatpush1.msra.mxu0 0.0
    %198 = vmatprep.subr.mxu0 0.0
    %199 = vmatpush1.msra.mxu0 0.0
    %200 = vmatprep.subr.mxu0 0.0
    %201 = vmatpush1.msra.mxu0 0.0
    %202 = vmatprep.mubr.f32.mxu0 0.0
    %203 = vmatmul.mubr.f32.gmra.mrb[0].mxu0 %v93
    %v204 = vpop.f32.mrb[0].mxu0
    %v205 = vadd.f32 %v131, %v204
    %v206 = vpop.f32.mrb[0].mxu0
    %v207 = vadd.f32 %v135, %v206
    %208 = vdwg.mxu0
    %vm209 = vcmp.gt.f32.partialorder %v205, 0.0
    %vm210 = vcmp.gt.f32.partialorder %v207, 0.0
    %v211 = vmul.f32 %v205, 0.01
    %v212 = vmul.f32 %v207, 0.01
    %v213 = vsel %vm209, %v205, %v211
    %v214 = vsel %vm210, %v207, %v212
    %v215 = vld [vmem:[#allocation4] sm:$0xff]
    %v216 = vld [vmem:[#allocation4 + $0x8] sm:$0xff]
    %v217 = vld [vmem:[#allocation4 + $0x10] sm:$0xff]
    %v218 = vld [vmem:[#allocation4 + $0x18] sm:$0xff]
    %v219 = vld [vmem:[#allocation4 + $0x20] sm:$0xff]
    %v220 = vld [vmem:[#allocation4 + $0x28] sm:$0xff]
    %v221 = vld [vmem:[#allocation4 + $0x30] sm:$0xff]
    %v222 = vld [vmem:[#allocation4 + $0x38] sm:$0xff]
    %v223 = vld [vmem:[#allocation4 + $0x40] sm:$0xff]
    %v224 = vld [vmem:[#allocation4 + $0x48] sm:$0xff]
    %v225 = vld [vmem:[#allocation4 + $0x50] sm:$0xff]
    %v226 = vld [vmem:[#allocation4 + $0x58] sm:$0xff]
    %v227 = vld [vmem:[#allocation4 + $0x60] sm:$0xff]
    %v228 = vld [vmem:[#allocation4 + $0x68] sm:$0xff]
    %v229 = vld [vmem:[#allocation4 + $0x70] sm:$0xff]
    %v230 = vld [vmem:[#allocation4 + $0x78] sm:$0xff]
    %v231 = vld [vmem:[#allocation4 + $0x80] sm:$0xff]
    %v232 = vld [vmem:[#allocation4 + $0x88] sm:$0xff]
    %v233 = vld [vmem:[#allocation4 + $0x90] sm:$0xff]
    %v234 = vld [vmem:[#allocation4 + $0x98] sm:$0xff]
    %v235 = vld [vmem:[#allocation4 + $0xa0] sm:$0xff]
    %v236 = vld [vmem:[#allocation4 + $0xa8] sm:$0xff]
    %v237 = vld [vmem:[#allocation4 + $0xb0] sm:$0xff]
    %v238 = vld [vmem:[#allocation4 + $0xb8] sm:$0xff]
    %v239 = vld [vmem:[#allocation4 + $0xc0] sm:$0xff]
    %v240 = vld [vmem:[#allocation4 + $0xc8] sm:$0xff]
    %v241 = vld [vmem:[#allocation4 + $0xd0] sm:$0xff]
    %v242 = vld [vmem:[#allocation4 + $0xd8] sm:$0xff]
    %v243 = vld [vmem:[#allocation4 + $0xe0] sm:$0xff]
    %v244 = vld [vmem:[#allocation4 + $0xe8] sm:$0xff]
    %v245 = vld [vmem:[#allocation4 + $0xf0] sm:$0xff]
    %v246 = vld [vmem:[#allocation4 + $0xf8] sm:$0xff]
    %v247 = vld [vmem:[%s4] sm:$0x1]
    %v249 = vlaneseq
    %v250 = vshrl.u32 %v249, 7
    %v251 = vsub.s32 0, %v250
    %v252 = vrot.slane %v247, %v251
    %254 = vmatprep.subr.mxu0 0.0
    %255 = vmatpush1.msra.mxu0 %v215
    %256 = vmatprep.subr.mxu0 0.0
    %257 = vmatpush1.msra.mxu0 %v216
    %258 = vmatprep.subr.mxu0 0.0
    %259 = vmatpush1.msra.mxu0 %v217
    %260 = vmatprep.subr.mxu0 0.0
    %261 = vmatpush1.msra.mxu0 %v218
    %262 = vmatprep.subr.mxu0 0.0
    %263 = vmatpush1.msra.mxu0 %v219
    %264 = vmatprep.subr.mxu0 0.0
    %265 = vmatpush1.msra.mxu0 %v220
    %266 = vmatprep.subr.mxu0 0.0
    %267 = vmatpush1.msra.mxu0 %v221
    %268 = vmatprep.subr.mxu0 0.0
    %269 = vmatpush1.msra.mxu0 %v222
    %270 = vmatprep.subr.mxu0 0.0
    %271 = vmatpush1.msra.mxu0 %v223
    %272 = vmatprep.subr.mxu0 0.0
    %273 = vmatpush1.msra.mxu0 %v224
    %274 = vmatprep.subr.mxu0 0.0
    %275 = vmatpush1.msra.mxu0 %v225
    %276 = vmatprep.subr.mxu0 0.0
    %277 = vmatpush1.msra.mxu0 %v226
    %278 = vmatprep.subr.mxu0 0.0
    %279 = vmatpush1.msra.mxu0 %v227
    %280 = vmatprep.subr.mxu0 0.0
    %281 = vmatpush1.msra.mxu0 %v228
    %282 = vmatprep.subr.mxu0 0.0
    %283 = vmatpush1.msra.mxu0 %v229
    %284 = vmatprep.subr.mxu0 0.0
    %285 = vmatpush1.msra.mxu0 %v230
    %286 = vmatprep.subr.mxu0 0.0
    %287 = vmatpush1.msra.mxu0 %v231
    %288 = vmatprep.subr.mxu0 0.0
    %289 = vmatpush1.msra.mxu0 %v232
    %290 = vmatprep.subr.mxu0 0.0
    %291 = vmatpush1.msra.mxu0 %v233
    %292 = vmatprep.subr.mxu0 0.0
    %293 = vmatpush1.msra.mxu0 %v234
    %294 = vmatprep.subr.mxu0 0.0
    %295 = vmatpush1.msra.mxu0 %v235
    %296 = vmatprep.subr.mxu0 0.0
    %297 = vmatpush1.msra.mxu0 %v236
    %298 = vmatprep.subr.mxu0 0.0
    %299 = vmatpush1.msra.mxu0 %v237
    %300 = vmatprep.subr.mxu0 0.0
    %301 = vmatpush1.msra.mxu0 %v238
    %302 = vmatprep.subr.mxu0 0.0
    %303 = vmatpush1.msra.mxu0 %v239
    %304 = vmatprep.subr.mxu0 0.0
    %305 = vmatpush1.msra.mxu0 %v240
    %306 = vmatprep.subr.mxu0 0.0
    %307 = vmatpush1.msra.mxu0 %v241
    %308 = vmatprep.subr.mxu0 0.0
    %309 = vmatpush1.msra.mxu0 %v242
    %310 = vmatprep.subr.mxu0 0.0
    %311 = vmatpush1.msra.mxu0 %v243
    %312 = vmatprep.subr.mxu0 0.0
    %313 = vmatpush1.msra.mxu0 %v244
    %314 = vmatprep.subr.mxu0 0.0
    %315 = vmatpush1.msra.mxu0 %v245
    %316 = vmatprep.subr.mxu0 0.0
    %317 = vmatpush1.msra.mxu0 %v246
    %318 = vmatprep.mubr.f32.mxu0 %v214
    %319 = vmatmul.mubr.f32.gmra.mrb[0].mxu0 %v213
    %v320 = vpop.f32.mrb[0].mxu0
    %v321 = vadd.f32 %v252, %v320
    %v322 = vpop.f32.mrb[0].mxu0
    %323 = vdwg.mxu0
    %vm324 = vcmp.gt.f32.partialorder %v321, 0.0
    %v325 = vmul.f32 %v321, 0.01
    %v326 = vsel %vm324, %v321, %v325
    %v327 = vld [vmem:[#allocation6] sm:$0xff]
    %v328 = vld [vmem:[#allocation6 + $0x8] sm:$0xff]
    %v329 = vld [vmem:[#allocation6 + $0x10] sm:$0xff]
    %v330 = vld [vmem:[#allocation6 + $0x18] sm:$0xff]
    %v331 = vld [vmem:[#allocation6 + $0x20] sm:$0xff]
    %v332 = vld [vmem:[#allocation6 + $0x28] sm:$0xff]
    %v333 = vld [vmem:[#allocation6 + $0x30] sm:$0xff]
    %v334 = vld [vmem:[#allocation6 + $0x38] sm:$0xff]
    %v335 = vld [vmem:[#allocation6 + $0x40] sm:$0xff]
    %v336 = vld [vmem:[#allocation6 + $0x48] sm:$0xff]
    %v337 = vld [vmem:[#allocation6 + $0x50] sm:$0xff]
    %v338 = vld [vmem:[#allocation6 + $0x58] sm:$0xff]
    %v339 = vld [vmem:[#allocation6 + $0x60] sm:$0xff]
    %v340 = vld [vmem:[#allocation6 + $0x68] sm:$0xff]
    %v341 = vld [vmem:[#allocation6 + $0x70] sm:$0xff]
    %v342 = vld [vmem:[#allocation6 + $0x78] sm:$0xff]
    %v343 = vld [vmem:[%s6] sm:$0x1]
    %v345 = vlaneseq
    %v346 = vshrl.u32 %v345, 7
    %v347 = vsub.s32 0, %v346
    %v348 = vrot.slane %v343, %v347
    %350 = vmatprep.subr.mxu0 0.0
    %351 = vmatpush1.msra.mxu0 %v327
    %352 = vmatprep.subr.mxu0 0.0
    %353 = vmatpush1.msra.mxu0 %v328
    %354 = vmatprep.subr.mxu0 0.0
    %355 = vmatpush1.msra.mxu0 %v329
    %356 = vmatprep.subr.mxu0 0.0
    %357 = vmatpush1.msra.mxu0 %v330
    %358 = vmatprep.subr.mxu0 0.0
    %359 = vmatpush1.msra.mxu0 %v331
    %360 = vmatprep.subr.mxu0 0.0
    %361 = vmatpush1.msra.mxu0 %v332
    %362 = vmatprep.subr.mxu0 0.0
    %363 = vmatpush1.msra.mxu0 %v333
    %364 = vmatprep.subr.mxu0 0.0
    %365 = vmatpush1.msra.mxu0 %v334
    %366 = vmatprep.subr.mxu0 0.0
    %367 = vmatpush1.msra.mxu0 %v335
    %368 = vmatprep.subr.mxu0 0.0
    %369 = vmatpush1.msra.mxu0 %v336
    %370 = vmatprep.subr.mxu0 0.0
    %371 = vmatpush1.msra.mxu0 %v337
    %372 = vmatprep.subr.mxu0 0.0
    %373 = vmatpush1.msra.mxu0 %v338
    %374 = vmatprep.subr.mxu0 0.0
    %375 = vmatpush1.msra.mxu0 %v339
    %376 = vmatprep.subr.mxu0 0.0
    %377 = vmatpush1.msra.mxu0 %v340
    %378 = vmatprep.subr.mxu0 0.0
    %379 = vmatpush1.msra.mxu0 %v341
    %380 = vmatprep.subr.mxu0 0.0
    %381 = vmatpush1.msra.mxu0 %v342
    %382 = vmatprep.subr.mxu0 0.0
    %383 = vmatpush1.msra.mxu0 0.0
    %384 = vmatprep.subr.mxu0 0.0
    %385 = vmatpush1.msra.mxu0 0.0
    %386 = vmatprep.subr.mxu0 0.0
    %387 = vmatpush1.msra.mxu0 0.0
    %388 = vmatprep.subr.mxu0 0.0
    %389 = vmatpush1.msra.mxu0 0.0
    %390 = vmatprep.subr.mxu0 0.0
    %391 = vmatpush1.msra.mxu0 0.0
    %392 = vmatprep.subr.mxu0 0.0
    %393 = vmatpush1.msra.mxu0 0.0
    %394 = vmatprep.subr.mxu0 0.0
    %395 = vmatpush1.msra.mxu0 0.0
    %396 = vmatprep.subr.mxu0 0.0
    %397 = vmatpush1.msra.mxu0 0.0
    %398 = vmatprep.subr.mxu0 0.0
    %399 = vmatpush1.msra.mxu0 0.0
    %400 = vmatprep.subr.mxu0 0.0
    %401 = vmatpush1.msra.mxu0 0.0
    %402 = vmatprep.subr.mxu0 0.0
    %403 = vmatpush1.msra.mxu0 0.0
    %404 = vmatprep.subr.mxu0 0.0
    %405 = vmatpush1.msra.mxu0 0.0
    %406 = vmatprep.subr.mxu0 0.0
    %407 = vmatpush1.msra.mxu0 0.0
    %408 = vmatprep.subr.mxu0 0.0
    %409 = vmatpush1.msra.mxu0 0.0
    %410 = vmatprep.subr.mxu0 0.0
    %411 = vmatpush1.msra.mxu0 0.0
    %412 = vmatprep.subr.mxu0 0.0
    %413 = vmatpush1.msra.mxu0 0.0
    %414 = vmatprep.mubr.f32.mxu0 0.0
    %415 = vmatmul.mubr.f32.gmra.mrb[0].mxu0 %v326
    %v416 = vpop.f32.mrb[0].mxu0
    %v417 = vadd.f32 %v348, %v416
    %v418 = vpop.f32.mrb[0].mxu0
    %419 = vdwg.mxu0
    %vm420 = vcmp.gt.f32.partialorder %v417, 0.0
    %v421 = vmul.f32 %v417, 0.01
    %v422 = vsel %vm420, %v417, %v421
    %v423 = vld [vmem:[#allocation7] sm:$0xff]
    %v424 = vld [vmem:[#allocation7 + $0x8] sm:$0xff]
    %v425 = vld [vmem:[#allocation7 + $0x10] sm:$0xff]
    %v426 = vld [vmem:[#allocation7 + $0x18] sm:$0xff]
    %v427 = vld [vmem:[#allocation7 + $0x20] sm:$0xff]
    %v428 = vld [vmem:[#allocation7 + $0x28] sm:$0xff]
    %v429 = vld [vmem:[#allocation7 + $0x30] sm:$0xff]
    %v430 = vld [vmem:[#allocation7 + $0x38] sm:$0xff]
    %v431 = vld [vmem:[#allocation7 + $0x40] sm:$0xff]
    %v432 = vld [vmem:[#allocation7 + $0x48] sm:$0xff]
    %v433 = vld [vmem:[#allocation7 + $0x50] sm:$0xff]
    %v434 = vld [vmem:[#allocation7 + $0x58] sm:$0xff]
    %v435 = vld [vmem:[#allocation7 + $0x60] sm:$0xff]
    %v436 = vld [vmem:[#allocation7 + $0x68] sm:$0xff]
    %v437 = vld [vmem:[#allocation7 + $0x70] sm:$0xff]
    %v438 = vld [vmem:[#allocation7 + $0x78] sm:$0xff]
    %v439 = vld [vmem:[#allocation7 + $0x80] sm:$0xff]
    %v440 = vld [vmem:[#allocation7 + $0x88] sm:$0xff]
    %v441 = vld [vmem:[#allocation7 + $0x90] sm:$0xff]
    %v442 = vld [vmem:[#allocation7 + $0x98] sm:$0xff]
    %v443 = vld [vmem:[#allocation7 + $0xa0] sm:$0xff]
    %v444 = vld [vmem:[#allocation7 + $0xa8] sm:$0xff]
    %v445 = vld [vmem:[#allocation7 + $0xb0] sm:$0xff]
    %v446 = vld [vmem:[#allocation7 + $0xb8] sm:$0xff]
    %v447 = vld [vmem:[#allocation7 + $0xc0] sm:$0xff]
    %v448 = vld [vmem:[#allocation7 + $0xc8] sm:$0xff]
    %v449 = vld [vmem:[#allocation7 + $0xd0] sm:$0xff]
    %v450 = vld [vmem:[#allocation7 + $0xd8] sm:$0xff]
    %v451 = vld [vmem:[#allocation7 + $0xe0] sm:$0xff]
    %v452 = vld [vmem:[#allocation7 + $0xe8] sm:$0xff]
    %v453 = vld [vmem:[#allocation7 + $0xf0] sm:$0xff]
    %v454 = vld [vmem:[#allocation7 + $0xf8] sm:$0xff]
    %v455 = vld [vmem:[%s8] sm:$0x3]
    %v457 = vlaneseq
    %v458 = vshrl.u32 %v457, 7
    %v459 = vsub.s32 0, %v458
    %v460 = vrot.slane %v455, %v459
    %v461 = vlaneseq
    %v462 = vshrl.u32 %v461, 7
    %v463 = vsub.s32 1, %v462
    %v464 = vrot.slane %v455, %v463
    %467 = vmatprep.subr.mxu0 %v424
    %468 = vmatpush1.msra.mxu0 %v423
    %469 = vmatprep.subr.mxu0 %v426
    %470 = vmatpush1.msra.mxu0 %v425
    %471 = vmatprep.subr.mxu0 %v428
    %472 = vmatpush1.msra.mxu0 %v427
    %473 = vmatprep.subr.mxu0 %v430
    %474 = vmatpush1.msra.mxu0 %v429
    %475 = vmatprep.subr.mxu0 %v432
    %476 = vmatpush1.msra.mxu0 %v431
    %477 = vmatprep.subr.mxu0 %v434
    %478 = vmatpush1.msra.mxu0 %v433
    %479 = vmatprep.subr.mxu0 %v436
    %480 = vmatpush1.msra.mxu0 %v435
    %481 = vmatprep.subr.mxu0 %v438
    %482 = vmatpush1.msra.mxu0 %v437
    %483 = vmatprep.subr.mxu0 %v440
    %484 = vmatpush1.msra.mxu0 %v439
    %485 = vmatprep.subr.mxu0 %v442
    %486 = vmatpush1.msra.mxu0 %v441
    %487 = vmatprep.subr.mxu0 %v444
    %488 = vmatpush1.msra.mxu0 %v443
    %489 = vmatprep.subr.mxu0 %v446
    %490 = vmatpush1.msra.mxu0 %v445
    %491 = vmatprep.subr.mxu0 %v448
    %492 = vmatpush1.msra.mxu0 %v447
    %493 = vmatprep.subr.mxu0 %v450
    %494 = vmatpush1.msra.mxu0 %v449
    %495 = vmatprep.subr.mxu0 %v452
    %496 = vmatpush1.msra.mxu0 %v451
    %497 = vmatprep.subr.mxu0 %v454
    %498 = vmatpush1.msra.mxu0 %v453
    %499 = vmatprep.subr.mxu0 0.0
    %500 = vmatpush1.msra.mxu0 0.0
    %501 = vmatprep.subr.mxu0 0.0
    %502 = vmatpush1.msra.mxu0 0.0
    %503 = vmatprep.subr.mxu0 0.0
    %504 = vmatpush1.msra.mxu0 0.0
    %505 = vmatprep.subr.mxu0 0.0
    %506 = vmatpush1.msra.mxu0 0.0
    %507 = vmatprep.subr.mxu0 0.0
    %508 = vmatpush1.msra.mxu0 0.0
    %509 = vmatprep.subr.mxu0 0.0
    %510 = vmatpush1.msra.mxu0 0.0
    %511 = vmatprep.subr.mxu0 0.0
    %512 = vmatpush1.msra.mxu0 0.0
    %513 = vmatprep.subr.mxu0 0.0
    %514 = vmatpush1.msra.mxu0 0.0
    %515 = vmatprep.subr.mxu0 0.0
    %516 = vmatpush1.msra.mxu0 0.0
    %517 = vmatprep.subr.mxu0 0.0
    %518 = vmatpush1.msra.mxu0 0.0
    %519 = vmatprep.subr.mxu0 0.0
    %520 = vmatpush1.msra.mxu0 0.0
    %521 = vmatprep.subr.mxu0 0.0
    %522 = vmatpush1.msra.mxu0 0.0
    %523 = vmatprep.subr.mxu0 0.0
    %524 = vmatpush1.msra.mxu0 0.0
    %525 = vmatprep.subr.mxu0 0.0
    %526 = vmatpush1.msra.mxu0 0.0
    %527 = vmatprep.subr.mxu0 0.0
    %528 = vmatpush1.msra.mxu0 0.0
    %529 = vmatprep.subr.mxu0 0.0
    %530 = vmatpush1.msra.mxu0 0.0
    %531 = vmatprep.mubr.f32.mxu0 0.0
    %532 = vmatmul.mubr.f32.gmra.mrb[0].mxu0 %v422
    %v533 = vpop.f32.mrb[0].mxu0
    %v534 = vadd.f32 %v460, %v533
    %v535 = vpop.f32.mrb[0].mxu0
    %v536 = vadd.f32 %v464, %v535
    %537 = vdwg.mxu0
    %538 = vst [vmem:[%s10] sm:$0xff] %v534
    %539 = vst [vmem:[%s11] sm:$0xff] %v536
    %v540 = vmul.f32 %v536, 0.5
    %v541 = vmul.f32 %v540, 1.442695
    %v542 = vpow.pop %v541
    %v543 = vld [vmem:[%s9] sm:$0xff]
    %v544 = vmul.f32 %v542, %v543
    %v545 = vadd.f32 %v534, %v544
    %546 = vst [vmem:[%s12] sm:$0xff] %v545
    // Predicated region
    $region58: #{encoder_forward.1} parent=1 // pred_check
      _
    $region59: #{encoder_forward.1} parent=1 // pred_check_branch
      %548 = sbr.rel (0) target = $region61
    $region60: #{encoder_forward.1} parent=1 // pred_region
      _
    $region61: #{encoder_forward.1} parent=1 // pred_fallthru
      _
    // Predicated region
    $region62: #{encoder_forward.1} parent=1 // pred_check
      _
    $region63: #{encoder_forward.1} parent=1 // pred_check_branch
      %550 = sbr.rel (0) target = $region65
    $region64: #{encoder_forward.1} parent=1 // pred_region
      _
    $region65: #{encoder_forward.1} parent=1 // pred_fallthru
      _
    // Predicated region
    $region66: #{encoder_forward.1} parent=1 // pred_check
      _
    $region67: #{encoder_forward.1} parent=1 // pred_check_branch
      %552 = sbr.rel (0) target = $region69
    $region68: #{encoder_forward.1} parent=1 // pred_region
      _
    $region69: #{encoder_forward.1} parent=1 // pred_fallthru
      _
    // Predicated region
    $region70: #{encoder_forward.1} parent=1 // pred_check
      _
    $region71: #{encoder_forward.1} parent=1 // pred_check_branch
      %554 = sbr.rel (0) target = $region73
    $region72: #{encoder_forward.1} parent=1 // pred_region
      _
    $region73: #{encoder_forward.1} parent=1 // pred_fallthru
      _
    // Predicated region
    $region74: #{encoder_forward.1} parent=1 // pred_check
      _
    $region75: #{encoder_forward.1} parent=1 // pred_check_branch
      %556 = sbr.rel (0) target = $region77
    $region76: #{encoder_forward.1} parent=1 // pred_region
      _
    $region77: #{encoder_forward.1} parent=1 // pred_fallthru
      _
    // Predicated region
    $region78: #{encoder_forward.1} parent=1 // pred_check
      _
    $region79: #{encoder_forward.1} parent=1 // pred_check_branch
      %558 = sbr.rel (0) target = $region81
    $region80: #{encoder_forward.1} parent=1 // pred_region
      _
    $region81: #{encoder_forward.1} parent=1 // pred_fallthru
      _
    %559 = vsyncpa [#allocation3], 1
    %560 = vsyncpa [#allocation5], 1
    %561 = vsyncpa [#allocation8], 1

</llo_original>
